<compile_context>
chip_gen: v7x
topology: tpu7x:2x2x1
jax: 0.10.0
libtpu: 0.0.40
codegen_flags: <defaults>
</compile_context>

<pallas_src>
import jax
import jax.numpy as jnp
from jax.experimental import pallas as pl
from jax.experimental.pallas import tpu as pltpu


def _make_masked_ce_kernel(batch: int, tb: int, nb_inner: int, compute_dtype):
    """Kernel factory; batch size / tile rows / inner grid extent are static."""

    def kernel(logits_ref, wm_ref, logit_t_ref, out_ref):
        c = pl.program_id(0)          # parallel (TensorCore) axis
        i = pl.program_id(1)          # batch-tile reduction axis

        # Zero this core's resident accumulator block once.
        @pl.when(i == 0)
        def _():
            out_ref[...] = jnp.zeros_like(out_ref)

        x = logits_ref[...]
        if x.dtype != compute_dtype:
            x = x.astype(compute_dtype)            # VPU-side cast (f32 or bf16)

        # Numerically stable log-sum-exp over the class (lane) axis.
        # TODO(synk): for vocab-scale C (>= ~32k), chunk the class axis with a
        # lax.fori_loop carrying running max/sum (flash-softmax style) so the
        # intermediates stay bounded and TB can stay large on v7x's 64 MiB VMEM.
        m = jnp.max(x, axis=-1, keepdims=True)                        # (TB,1)
        e = jnp.exp(x - m)                                            # (TB,C) compute dtype
        s = jnp.sum(e.astype(jnp.float32), axis=-1, keepdims=True)    # (TB,1) f32
        lse = m.astype(jnp.float32) + jnp.log(s)                      # (TB,1) f32

        ce = lse - logit_t_ref[...]                                   # (TB,1) f32
        wm = wm_ref[...]                                              # (TB,1) f32 = mask*weight[t]

        # Gate (a) padded rows of ragged / duplicated blocks and (b) masked-out
        # rows, so garbage / NaN logits never reach the accumulator.
        rows = x.shape[0]
        row = (c * nb_inner + i) * tb + jax.lax.broadcasted_iota(
            jnp.int32, (rows, 1), 0)
        gate = (row < batch) & (wm != 0.0)
        contrib = jnp.where(gate, wm * ce, 0.0)

        # Broadcast-add the tile partial into the lane-dense resident block
        # (exactly one f32 vreg, unmasked store); reduced to a scalar in the wrapper.
        out_ref[...] += jnp.sum(contrib)

    return kernel


def _vmem_budgets():
    """Generation-aware (per-logits-buffer byte budget, vmem_limit_bytes)."""
    try:
        cap = int(pltpu.get_tpu_info().vmem_capacity_bytes)
    except Exception:
        cap = 64 * 1024 * 1024                    # conservative (v7x-sized) fallback
    if cap <= 64 * 1024 * 1024:                   # v7x-class: 64 MiB physical per TC
        return 4 * 1024 * 1024, 48 * 1024 * 1024
    return 8 * 1024 * 1024, 64 * 1024 * 1024      # v5e / v6e: 128 MiB physical


def masked_cross_entropy_loss(logits, target, mask, weight, reduction="mean",
                              block_rows=None, num_parallel=None,
                              compute_dtype=None, validate=False):
    """logits: (B, C) float (any dtype); target: (B,) int; mask: (B,) bool/int;
    weight: (C,) float.  Returns the scalar weighted cross-entropy over masked rows."""
    B, C = logits.shape

    if validate:
        # Mirrors the PyTorch ValueError; host sync, so kept off the jit hot path.
        # With validate=False and an all-zero mask, 'mean' returns NaN.
        if not bool(jax.device_get(jnp.any(mask != 0))):
            raise ValueError("Mask in MaskedCrossEntropyLoss is all zeros.")

    target_i = target.astype(jnp.int32)
    maskb = mask != 0

    # Hoisted per-row side inputs (each touches only B elements, not B*C):
    #   wm      = mask * weight[target]      -> kernel weighting & row gate
    #   logit_t = logits[row, target[row]]   -> removes in-kernel iota/select/reduce
    wm = jnp.where(maskb, weight.astype(jnp.float32)[target_i], 0.0).reshape(B, 1)
    # TODO(synk): out-of-range / negative targets are clamped here rather than
    # raising as PyTorch would.
    logit_t = jnp.take_along_axis(
        logits, target_i[:, None], axis=-1, mode="clip").astype(jnp.float32)
    wsum = jnp.sum(wm)                            # 'mean' denominator (tiny XLA reduce)

    # ---- batch-tile sizing: byte budget, generation-aware -------------------
    itemsize = jnp.dtype(logits.dtype).itemsize
    sublane = max(8, 32 // itemsize)              # 8 rows f32, 16 bf16, 32 int8
    per_buf_budget, vmem_limit = _vmem_budgets()
    if block_rows is None:
        tb = per_buf_budget // max(1, C * itemsize)
    else:
        tb = block_rows
    tb = max(sublane, (tb // sublane) * sublane)
    if tb >= B:
        tb = B                                    # single full-extent block is always legal
    nb = pl.cdiv(B, tb)

    # ---- parallel (multi-TensorCore) split of the batch loop ----------------
    if num_parallel is None:
        num_par = 2 if nb >= 2 else 1             # v7x: 2 TCs; harmless loop split on 1-TC chips
    else:
        num_par = max(1, min(int(num_parallel), nb))
    nbi = pl.cdiv(nb, num_par)

    cdtype = jnp.float32 if compute_dtype is None else jnp.dtype(compute_dtype)
    kernel = _make_masked_ce_kernel(B, tb, nbi, cdtype)

    def tile_map(c, i):
        # Clamp duplicated tail steps onto the last real block; their rows are
        # fully gated out inside the kernel (row >= B), so they contribute zero.
        return (jnp.minimum(c * nbi + i, nb - 1), 0)

    out = pl.pallas_call(
        kernel,
        out_shape=jax.ShapeDtypeStruct((num_par, 8, 128), jnp.float32),
        grid=(num_par, nbi),
        in_specs=[
            pl.BlockSpec((tb, C), tile_map),      # logits tile (input dtype)
            pl.BlockSpec((tb, 1), tile_map),      # mask * weight[target]
            pl.BlockSpec((tb, 1), tile_map),      # logits[row, target[row]]
        ],
        out_specs=pl.BlockSpec((1, 8, 128), lambda c, i: (c, 0, 0)),
        compiler_params=pltpu.CompilerParams(
            dimension_semantics=("parallel", "arbitrary"),
            vmem_limit_bytes=vmem_limit,
        ),
    )(logits, wm, logit_t)

    lsum = jnp.sum(out[:, 0, 0])                  # per-core partials -> scalar

    if reduction == "mean":
        return lsum / wsum
    elif reduction == "sum":
        return lsum
    else:
        # TODO(synk): reduction='none' returns a dynamically-shaped masked_select
        # result; not expressible as a static-shape TPU kernel output.
        raise NotImplementedError(f"reduction={reduction!r} not supported")


def _reference(logits, target, mask, weight):
    # Pure-JAX reference replicating masked_select + F.cross_entropy(mean).
    logits = logits.astype(jnp.float32)
    m = (mask != 0).astype(jnp.float32)
    lse = jax.nn.logsumexp(logits, axis=-1)
    logit_t = jnp.take_along_axis(
        logits, target[:, None].astype(jnp.int32), axis=-1)[:, 0]
    ce = lse - logit_t
    w_t = weight.astype(jnp.float32)[target.astype(jnp.int32)]
    return jnp.sum(m * w_t * ce) / jnp.sum(m * w_t)


if __name__ == "__main__":
    key = jax.random.PRNGKey(0)

    # --- test 1: small f32 problem, single block, single core slice ----------
    k1, k2, k3, k4 = jax.random.split(key, 4)
    B, C = 8, 16
    logits = jax.random.normal(k1, (B, C), dtype=jnp.float32)
    target = jax.random.randint(k2, (B,), 0, C, dtype=jnp.int32)
    mask = jax.random.bernoulli(k3, 0.6, (B,)).at[0].set(True)
    weight = 0.5 + jax.random.uniform(k4, (C,), dtype=jnp.float32)

    loss = masked_cross_entropy_loss(logits, target, mask, weight, reduction="mean")
    loss = jax.block_until_ready(loss)
    ref = _reference(logits, target, mask, weight)
    assert jnp.allclose(loss, ref, rtol=1e-5, atol=1e-5), (loss, ref)

    loss_s = masked_cross_entropy_loss(logits, target, mask, weight, reduction="sum")
    loss_s = jax.block_until_ready(loss_s)
    ref_s = ref * jnp.sum(jnp.where(mask, weight[target], 0.0))
    assert jnp.allclose(loss_s, ref_s, rtol=1e-5, atol=1e-5), (loss_s, ref_s)

    # --- test 2: bf16 logits, gridded batch, parallel core axis, ragged block
    k5, k6, k7, k8 = jax.random.split(jax.random.PRNGKey(1), 4)
    B2, C2 = 20, 128
    logits2 = jax.random.normal(k5, (B2, C2), dtype=jnp.float32).astype(jnp.bfloat16)
    target2 = jax.random.randint(k6, (B2,), 0, C2, dtype=jnp.int32)
    mask2 = jax.random.bernoulli(k7, 0.5, (B2,)).at[3].set(True)
    weight2 = 0.5 + jax.random.uniform(k8, (C2,), dtype=jnp.float32)

    loss2 = masked_cross_entropy_loss(logits2, target2, mask2, weight2,
                                      reduction="mean", block_rows=16)
    loss2 = jax.block_until_ready(loss2)
    ref2 = _reference(logits2, target2, mask2, weight2)
    assert jnp.allclose(loss2, ref2, rtol=1e-4, atol=1e-4), (loss2, ref2)

    # --- test 3: bf16 compute path (bf16-native VPU/EUP on v6e/v7x) ----------
    loss3 = masked_cross_entropy_loss(logits2, target2, mask2, weight2,
                                      reduction="mean", block_rows=16,
                                      compute_dtype=jnp.bfloat16)
    loss3 = jax.block_until_ready(loss3)
    assert jnp.allclose(loss3, ref2, rtol=3e-2, atol=3e-2), (loss3, ref2)

    print("KERNEL_OK")
</pallas_src>

<mosaic_0001>
module attributes {stable_mosaic.version = 11 : i64} {
  func.func @kernel(%arg0: i32, %arg1: i32, %arg2: memref<8x16xf32, #tpu.memory_space<vmem>>, %arg3: memref<8x1xf32, #tpu.memory_space<vmem>>, %arg4: memref<8x1xf32, #tpu.memory_space<vmem>>, %arg5: memref<1x8x128xf32, #tpu.memory_space<vmem>>) attributes {dimension_semantics = [#tpu.dimension_semantics<parallel>, #tpu.dimension_semantics<arbitrary>], iteration_bounds = array<i64: 1, 1>, scalar_prefetch = 0 : i64, scratch_operands = 0 : i64, tpu.core_type = #tpu.core_type<tc>, window_params = [{transform_indices = @transform_0, window_bounds = array<i64: 8, 16>}, {transform_indices = @transform_1, window_bounds = array<i64: 8, 1>}, {transform_indices = @transform_2, window_bounds = array<i64: 8, 1>}, {transform_indices = @transform_3, window_bounds = array<i64: 1, 8, 128>}]} {
    %c0_i32 = arith.constant 0 : i32
    %0 = arith.cmpi eq, %arg1, %c0_i32 : i32
    %1 = arith.extui %0 : i1 to i32
    %c0_i32_0 = arith.constant 0 : i32
    %2 = arith.cmpi ne, %1, %c0_i32_0 : i32
    scf.if %2 {
      %cst_17 = arith.constant 0.000000e+00 : f32
      %38 = vector.broadcast %cst_17 : f32 to vector<1x8x128xf32>
      %c0_18 = arith.constant 0 : index
      %c0_19 = arith.constant 0 : index
      %c0_20 = arith.constant 0 : index
      %39 = vector.load %arg5[%c0_18, %c0_19, %c0_20] : memref<1x8x128xf32, #tpu.memory_space<vmem>>, vector<1x8x128xf32>
      tpu.vector_store %arg5[%c0_18, %c0_19, %c0_20], %38 {strides = array<i32>} : memref<1x8x128xf32, #tpu.memory_space<vmem>>, vector<1x8x128xf32>,
    } else {
    }
    %c0 = arith.constant 0 : index
    %c0_1 = arith.constant 0 : index
    %3 = vector.load %arg2[%c0, %c0_1] : memref<8x16xf32, #tpu.memory_space<vmem>>, vector<8x16xf32>
    %cst = arith.constant dense<0xFF800000> : vector<8xf32>
    %4 = vector.multi_reduction <maximumf>, %3, %cst [1] : vector<8x16xf32> to vector<8xf32>
    %5 = vector.shape_cast %4 : vector<8xf32> to vector<8x1xf32>
    %6 = vector.broadcast %5 : vector<8x1xf32> to vector<8x16xf32>
    %7 = arith.subf %3, %6 : vector<8x16xf32>
    %8 = math.exp %7 : vector<8x16xf32>
    %cst_2 = arith.constant dense<0.000000e+00> : vector<8xf32>
    %9 = vector.multi_reduction <add>, %8, %cst_2 [1] : vector<8x16xf32> to vector<8xf32>
    %10 = vector.shape_cast %9 : vector<8xf32> to vector<8x1xf32>
    %11 = math.log %10 : vector<8x1xf32>
    %12 = arith.addf %5, %11 : vector<8x1xf32>
    %c0_3 = arith.constant 0 : index
    %c0_4 = arith.constant 0 : index
    %13 = vector.load %arg4[%c0_3, %c0_4] : memref<8x1xf32, #tpu.memory_space<vmem>>, vector<8x1xf32>
    %14 = arith.subf %12, %13 : vector<8x1xf32>
    %c0_5 = arith.constant 0 : index
    %c0_6 = arith.constant 0 : index
    %15 = vector.load %arg3[%c0_5, %c0_6] : memref<8x1xf32, #tpu.memory_space<vmem>>, vector<8x1xf32>
    %c1_i32 = arith.constant 1 : i32
    %16 = arith.muli %arg0, %c1_i32 : i32
    %17 = arith.addi %16, %arg1 : i32
    %c8_i32 = arith.constant 8 : i32
    %18 = arith.muli %17, %c8_i32 : i32
    %19 = tpu.iota {dimensions = array<i32: 0>} : vector<8x1xi32>
    %20 = vector.broadcast %18 : i32 to vector<8x1xi32>
    %21 = arith.addi %20, %19 : vector<8x1xi32>
    %c8_i32_7 = arith.constant 8 : i32
    %22 = vector.broadcast %c8_i32_7 : i32 to vector<8x1xi32>
    %23 = arith.cmpi slt, %21, %22 : vector<8x1xi32>
    %cst_8 = arith.constant 0.000000e+00 : f32
    %24 = vector.broadcast %cst_8 : f32 to vector<8x1xf32>
    %25 = arith.cmpf one, %15, %24 : vector<8x1xf32>
    %26 = arith.andi %23, %25 : vector<8x1xi1>
    %27 = arith.mulf %15, %14 : vector<8x1xf32>
    %cst_9 = arith.constant 0.000000e+00 : f32
    %28 = vector.broadcast %cst_9 : f32 to vector<8x1xf32>
    %29 = arith.select %26, %27, %28 : vector<8x1xi1>, vector<8x1xf32>
    %c0_10 = arith.constant 0 : index
    %c0_11 = arith.constant 0 : index
    %c0_12 = arith.constant 0 : index
    %30 = vector.load %arg5[%c0_10, %c0_11, %c0_12] : memref<1x8x128xf32, #tpu.memory_space<vmem>>, vector<1x8x128xf32>
    %31 = vector.shape_cast %29 : vector<8x1xf32> to vector<1x8x1xf32>
    %cst_13 = arith.constant dense<0.000000e+00> : vector<1xf32>
    %32 = vector.multi_reduction <add>, %31, %cst_13 [1, 2] : vector<1x8x1xf32> to vector<1xf32>
    %33 = vector.shape_cast %32 : vector<1xf32> to vector<1x1x1xf32>
    %34 = vector.extract %33[0, 0, 0] : f32 from vector<1x1x1xf32>
    %35 = vector.broadcast %34 : f32 to vector<1x8x128xf32>
    %36 = arith.addf %30, %35 : vector<1x8x128xf32>
    %c0_14 = arith.constant 0 : index
    %c0_15 = arith.constant 0 : index
    %c0_16 = arith.constant 0 : index
    %37 = vector.load %arg5[%c0_14, %c0_15, %c0_16] : memref<1x8x128xf32, #tpu.memory_space<vmem>>, vector<1x8x128xf32>
    tpu.vector_store %arg5[%c0_14, %c0_15, %c0_16], %36 {strides = array<i32>} : memref<1x8x128xf32, #tpu.memory_space<vmem>>, vector<1x8x128xf32>,
    return
  }
  func.func @transform_0(%arg0: i32, %arg1: i32) -> (i32, i32) {
    %c1_i32 = arith.constant 1 : i32
    %0 = arith.muli %arg0, %c1_i32 : i32
    %1 = arith.addi %0, %arg1 : i32
    %c0_i32 = arith.constant 0 : i32
    %2 = arith.minsi %1, %c0_i32 : i32
    %c0_i32_0 = arith.constant 0 : i32
    %c0_i32_1 = arith.constant 0 : i32
    return %2, %c0_i32_0 : i32, i32
  }
  func.func @transform_1(%arg0: i32, %arg1: i32) -> (i32, i32) {
    %c1_i32 = arith.constant 1 : i32
    %0 = arith.muli %arg0, %c1_i32 : i32
    %1 = arith.addi %0, %arg1 : i32
    %c0_i32 = arith.constant 0 : i32
    %2 = arith.minsi %1, %c0_i32 : i32
    %c0_i32_0 = arith.constant 0 : i32
    %c0_i32_1 = arith.constant 0 : i32
    return %2, %c0_i32_0 : i32, i32
  }
  func.func @transform_2(%arg0: i32, %arg1: i32) -> (i32, i32) {
    %c1_i32 = arith.constant 1 : i32
    %0 = arith.muli %arg0, %c1_i32 : i32
    %1 = arith.addi %0, %arg1 : i32
    %c0_i32 = arith.constant 0 : i32
    %2 = arith.minsi %1, %c0_i32 : i32
    %c0_i32_0 = arith.constant 0 : i32
    %c0_i32_1 = arith.constant 0 : i32
    return %2, %c0_i32_0 : i32, i32
  }
  func.func @transform_3(%arg0: i32, %arg1: i32) -> (i32, i32, i32) {
    %c0_i32 = arith.constant 0 : i32
    %c0_i32_0 = arith.constant 0 : i32
    %c0_i32_1 = arith.constant 0 : i32
    return %arg0, %c0_i32, %c0_i32_0 : i32, i32, i32
  }
}

</mosaic_0001>

<llo_original>
// kernel: tpu_custom_call.1
$region0: #{tpu_custom_call.1}
  #allocation0 [shape = 'u32[]', space=smem, size = 0x4, offset = 0x4, fixed_abs, tag = 'smem constant byte address 0x4 - core index']
  #allocation1 [shape = 'u32[144,128]{1,0:T(1,128)}', space=vmem, size = 0x12000, scoped, tag = 'internal scratch']
  %s0 = inlined_call_operand.vmem [shape: f32[8,16], index: 0, kind: input, shape index: {}]
  %s1 = inlined_call_operand.vmem [shape: f32[8,1], index: 1, kind: input, shape index: {}]
  %s2 = inlined_call_operand.vmem [shape: f32[8,1], index: 2, kind: input, shape index: {}]
  %s3 = inlined_call_operand.hbm [shape: f32[1,8,128], index: 3, kind: output, shape index: {}]
  %s4 = sld [smem:[#allocation0]]
  $region26: #{tpu_custom_call.1} parent=0
    _
  %s6 = ssub.s32 1, %s4
  %s7 = scalar_select 0, %s6, %s4
  $region1: #{tpu_custom_call.1} parent=0
    #allocation2 [shape = 'u8[4096]{0}', space=vmem, size = 0x1000, scoped, tag = 'output window, operand 0, single buffered']
    #allocation3 [shape = 's32[1]{0}', space=sflag, size = 0x4, scoped, tag = 'scoped memory for tpu_custom_call.1']
    %8 = vsyncpa [#allocation3], 0
    // Predicated region
    $region2: #{tpu_custom_call.1} parent=1 // pred_check
      _
    $region3: #{tpu_custom_call.1} parent=1 // pred_check_branch
      %10 = sbr.rel (0) target = $region5
    $region4: #{tpu_custom_call.1} parent=1 // pred_region
      %s11 = sadd.s32 0, 0
      %p12 = scmp.lt.s32.totalorder %s11, 0
      %s13 = scalar_select %p12, %s11, 0
      %p14 = scmp.lt.s32.totalorder %s13, 0
      %s15 = scalar_select %p14, %s13, 0
      %s16 = smul.addr %s15, 8
      %s17 = scalar_lea.vmem %s0, %s16
      %s18 = sadd.s32 0, 0
      %p19 = scmp.lt.s32.totalorder %s18, 0
      %s20 = scalar_select %p19, %s18, 0
    $region5: #{tpu_custom_call.1} parent=1 // pred_fallthru
      _
    // Predicated region
    $region6: #{tpu_custom_call.1} parent=1 // pred_check
      _
    $region7: #{tpu_custom_call.1} parent=1 // pred_check_branch
      %22 = sbr.rel (0) target = $region9
    $region8: #{tpu_custom_call.1} parent=1 // pred_region
      %s23 = sadd.s32 0, 0
      %p24 = scmp.lt.s32.totalorder %s23, 0
      %s25 = scalar_select %p24, %s23, 0
      %p26 = scmp.lt.s32.totalorder %s25, 0
      %s27 = scalar_select %p26, %s25, 0
      %s28 = smul.addr %s27, 8
      %s29 = scalar_lea.vmem %s1, %s28
      %s30 = sadd.s32 0, 0
      %p31 = scmp.lt.s32.totalorder %s30, 0
      %s32 = scalar_select %p31, %s30, 0
    $region9: #{tpu_custom_call.1} parent=1 // pred_fallthru
      _
    // Predicated region
    $region10: #{tpu_custom_call.1} parent=1 // pred_check
      _
    $region11: #{tpu_custom_call.1} parent=1 // pred_check_branch
      %34 = sbr.rel (0) target = $region13
    $region12: #{tpu_custom_call.1} parent=1 // pred_region
      %s35 = sadd.s32 0, 0
      %p36 = scmp.lt.s32.totalorder %s35, 0
      %s37 = scalar_select %p36, %s35, 0
      %p38 = scmp.lt.s32.totalorder %s37, 0
      %s39 = scalar_select %p38, %s37, 0
      %s40 = smul.addr %s39, 8
      %s41 = scalar_lea.vmem %s2, %s40
      %s42 = sadd.s32 0, 0
      %p43 = scmp.lt.s32.totalorder %s42, 0
      %s44 = scalar_select %p43, %s42, 0
    $region13: #{tpu_custom_call.1} parent=1 // pred_fallthru
      _
    %s45 = sadd.s32 0, 0
    %p46 = scmp.lt.s32.totalorder %s45, 0
    %s47 = scalar_select %p46, %s45, 0
    %p48 = scmp.lt.s32.totalorder %s47, 0
    %s49 = scalar_select %p48, %s47, 0
    %s50 = smul.addr %s49, 8
    %s51 = scalar_lea.vmem %s0, %s50
    %s52 = sadd.s32 0, 0
    %p53 = scmp.lt.s32.totalorder %s52, 0
    %s54 = scalar_select %p53, %s52, 0
    %p55 = scmp.lt.s32.totalorder %s54, 0
    %s56 = scalar_select %p55, %s54, 0
    %s57 = smul.addr %s56, 8
    %s58 = scalar_lea.vmem %s1, %s57
    %s59 = sadd.s32 0, 0
    %p60 = scmp.lt.s32.totalorder %s59, 0
    %s61 = scalar_select %p60, %s59, 0
    %p62 = scmp.lt.s32.totalorder %s61, 0
    %s63 = scalar_select %p62, %s61, 0
    %s64 = smul.addr %s63, 8
    %s65 = scalar_lea.vmem %s2, %s64
    %s66 = sadd.s32 0, 0
    %p67 = scmp.lt.s32.totalorder %s66, 0
    %s68 = scalar_select %p67, %s66, 0
    %p69 = scmp.lt.s32.totalorder %s68, 0
    %s70 = scalar_select %p69, %s68, 0
    %s71 = smul.addr %s70, 8
    %s72 = scalar_lea.vmem %s0, %s71
    %s73 = sadd.s32 0, 0
    %p74 = scmp.lt.s32.totalorder %s73, 0
    %s75 = scalar_select %p74, %s73, 0
    %s76 = sadd.s32 0, 0
    %p77 = scmp.lt.s32.totalorder %s76, 0
    %s78 = scalar_select %p77, %s76, 0
    %p79 = scmp.lt.s32.totalorder %s78, 0
    %s80 = scalar_select %p79, %s78, 0
    %s81 = smul.addr %s80, 8
    %s82 = scalar_lea.vmem %s1, %s81
    %s83 = sadd.s32 0, 0
    %p84 = scmp.lt.s32.totalorder %s83, 0
    %s85 = scalar_select %p84, %s83, 0
    %s86 = sadd.s32 0, 0
    %p87 = scmp.lt.s32.totalorder %s86, 0
    %s88 = scalar_select %p87, %s86, 0
    %p89 = scmp.lt.s32.totalorder %s88, 0
    %s90 = scalar_select %p89, %s88, 0
    %s91 = smul.addr %s90, 8
    %s92 = scalar_lea.vmem %s2, %s91
    %s93 = sadd.s32 0, 0
    %p94 = scmp.lt.s32.totalorder %s93, 0
    %s95 = scalar_select %p94, %s93, 0
    %p96 = scmp.eq.s32.totalorder 0, 0
    // Predicated region
    $region14: #{tpu_custom_call.1} parent=1 // pred_check
      %p97 = pneg %p96
    $region15: #{tpu_custom_call.1} parent=1 // pred_check_branch
      %99 = sbr.rel (%p97) target = $region17
    $region16: #{tpu_custom_call.1} parent=1 // pred_region
      %100 = vst [vmem:[#allocation2] sm:$0xff] 0.0
    $region17: #{tpu_custom_call.1} parent=1 // pred_fallthru
      _
    %v101 = vld [vmem:[%s72] sm:$0xff]
    %vm102 = vcmask 130048
    %v103 = vsel %vm102, %v101, -inf
    %104 = vmax.xlane.f32.xlu0 %v103
    %v105 = vpop.xlane.xlu0 %104
    %v106 = vsub.f32 %v101, %v105
    %v107 = vmul.f32 %v106, 1.442695
    %v108 = vpow.pop %v107
    %v109 = vsel %vm102, %v108, 0.0
    %110 = vadd.xlane.f32.xlu0 %v109
    %v111 = vpop.xlane.xlu0 %110
    %v112 = vlog2.pop %v111
    %v113 = vmul.f32 %v112, 0.6931472
    %v114 = vadd.f32 %v105, %v113
    %v115 = vld [vmem:[%s92] sm:$0xff]
    %v116 = vsub.f32 %v114, %v115
    %v117 = vld [vmem:[%s82] sm:$0xff]
    %s118 = sadd.s32 0, 0
    %s119 = smul.u32 %s118, 8
    %v120 = vlaneseq
    %v121 = vshrl.u32 %v120, 7
    %v122 = vstv %s119
    %v123 = vadd.s32 %v122, %v121
    %vm124 = vcmp.lt.s32.totalorder %v123, 8
    %vm125 = vcmp.ne.f32.partialorder %v117, 0.0
    %vm126 = vmand %vm124, %vm125
    %v127 = vmul.f32 %v117, %v116
    %v128 = vsel %vm126, %v127, 0.0
    %v129 = vld [vmem:[#allocation2] sm:$0xff]
    %vm130 = vcmask 7168
    %v131 = vsel %vm130, %v128, 0.0
    %132 = vadd.xlane.f32.xlu0 %v131
    %v133 = vpop.xlane.xlu0 %132
    %v134 = vrot.slane %v133, 4
    %v135 = vadd.f32 %v133, %v134
    %v136 = vrot.slane %v135, 2
    %v137 = vadd.f32 %v135, %v136
    %v138 = vrot.slane %v137, 1
    %v139 = vadd.f32 %v137, %v138
    %s140 = vtos %v139
    %v141 = vstv %s140
    %v142 = vadd.f32 %v129, %v141
    %143 = vst [vmem:[#allocation2] sm:$0xff] %v142
    // Predicated region
    $region18: #{tpu_custom_call.1} parent=1 // pred_check
      _
    $region19: #{tpu_custom_call.1} parent=1 // pred_check_branch
      %145 = sbr.rel (0) target = $region21
    $region20: #{tpu_custom_call.1} parent=1 // pred_region
      %s147 = ssub.s32 128, 128
      %148 = vsyncadd [#allocation3], %s147
      %s150 = sshll.u32 [#allocation2], 4
      %s151 = int_to_ptr.vmem [resolvable:$true] %s150
      %153 = dma.vmem_to_hbm [thread:$0]  %s151, 128, %s3, [#allocation3]
    $region21: #{tpu_custom_call.1} parent=1 // pred_fallthru
      _
    // Predicated region
    $region22: #{tpu_custom_call.1} parent=1 // pred_check
      _
    $region23: #{tpu_custom_call.1} parent=1 // pred_check_branch
      %155 = sbr.rel (0) target = $region25
    $region24: #{tpu_custom_call.1} parent=1 // pred_region
      %156 = dma.done [#allocation3], 128
    $region25: #{tpu_custom_call.1} parent=1 // pred_fallthru
      _
    %157 = vsyncpa [#allocation3], 1

</llo_original>
